<compile_context>
chip_gen: v7x
topology: tpu7x:2x2x1
jax: 0.10.0
libtpu: 0.0.40
codegen_flags: <defaults>
</compile_context>

<pallas_src>
import functools

import jax
import jax.numpy as jnp
from jax.experimental import pallas as pl
from jax.experimental.pallas import tpu as pltpu


LANE = 128          # output class dim is padded to a multiple of this
DEFAULT_TB = 1024   # batch tile: multiple of 256 (v6e/v7x) and 128 (v5e)
_NEG_BIG = -1e30    # mask value for padded class lanes (exp() underflows to 0)


def _round_up(x, m):
    return (x + m - 1) // m * m


def classifier_kernel(x_ref,
                      we1_ref, be1_ref, we2_ref, be2_ref,   # encoder params
                      w1_ref, b1_ref, w2_ref, b2_ref,       # Linear(inputSize,64), Linear(64,32)
                      w3_ref, b3_ref,                       # Linear(32, n_classes) padded to LANE
                      out_ref, *, n_valid):
    """One batch tile: encoder MLP -> classifier head -> masked softmax."""
    x = x_ref[...]                                   # bf16 (TB, d_in)

    def lin_relu(h_bf16, w_ref, b_ref):
        h = jnp.dot(h_bf16, w_ref[...], preferred_element_type=jnp.float32)
        h = h + b_ref[...].astype(jnp.float32)
        # cast back to bf16 so the next dot is a native bf16 MXU matmul
        return jnp.maximum(h, 0.0).astype(jnp.bfloat16)

    # ---- autoEncoder.encoder (assumed 2-layer MLP, see TODO at top) ----
    h = lin_relu(x, we1_ref, be1_ref)
    h = lin_relu(h, we2_ref, be2_ref)
    # ---- classifier head: Linear -> ReLU -> Linear -> ReLU -> Linear ----
    h = lin_relu(h, w1_ref, b1_ref)
    h = lin_relu(h, w2_ref, b2_ref)
    logits = jnp.dot(h, w3_ref[...], preferred_element_type=jnp.float32)
    logits = logits + b3_ref[...].astype(jnp.float32)

    # mask padded class lanes before the softmax max/exp
    lane_ids = jax.lax.broadcasted_iota(jnp.int32, logits.shape, 1)
    logits = jnp.where(lane_ids < n_valid, logits, _NEG_BIG)

    # ---- Softmax(dim=1), numerically stable, divide via EUP reciprocal ----
    m = jnp.max(logits, axis=1, keepdims=True)
    e = jnp.exp(logits - m)
    s = jnp.sum(e, axis=1, keepdims=True)
    out_ref[...] = e * pl.reciprocal(s, approx=True)


def classifier_forward(x, params, *, n_classes, block_batch=DEFAULT_TB):
    batch, d_in = x.shape
    out_lanes = _round_up(n_classes, LANE)

    # Batch tile: big enough to feed the MXU / amortize per-step overhead,
    # but never larger than the (8-rounded) batch itself.
    tb = min(block_batch, _round_up(batch, 8))
    batch_p = _round_up(batch, tb)

    x_bf16 = x.astype(jnp.bfloat16)
    if batch_p != batch:
        x_bf16 = jnp.pad(x_bf16, ((0, batch_p - batch), (0, 0)))

    def bf(name):
        return params[name].astype(jnp.bfloat16)

    # Pad the final layer's output dim to `out_lanes` (zeros; masked in-kernel).
    w3p = jnp.pad(bf("w3"), ((0, 0), (0, out_lanes - n_classes)))
    b3p = jnp.pad(bf("b3"), ((0, 0), (0, out_lanes - n_classes)))

    weights = (bf("we1"), bf("be1"), bf("we2"), bf("be2"),
               bf("w1"), bf("b1"), bf("w2"), bf("b2"), w3p, b3p)

    grid = (batch_p // tb,)

    x_spec = pl.BlockSpec((tb, d_in), lambda i: (i, 0))
    out_spec = pl.BlockSpec((tb, out_lanes), lambda i: (i, 0))
    # Weights/biases: full-array blocks with a constant index_map so Pallas
    # keeps them resident in VMEM across grid steps (only x/out are streamed).
    w_specs = [pl.BlockSpec(w.shape, lambda i: (0, 0)) for w in weights]

    # Advisory cost estimate (whole call).
    flops = 2 * batch_p * sum(int(w.shape[0]) * int(w.shape[1])
                              for w in weights[::2])
    bytes_accessed = (int(x_bf16.size) * 2                  # bf16 input stream
                      + batch_p * out_lanes * 4             # f32 output stream
                      + sum(int(w.size) * 2 for w in weights))
    cost = pl.CostEstimate(flops=flops,
                           transcendentals=batch_p * out_lanes,
                           bytes_accessed=bytes_accessed)

    out = pl.pallas_call(
        functools.partial(classifier_kernel, n_valid=n_classes),
        out_shape=jax.ShapeDtypeStruct((batch_p, out_lanes), jnp.float32),
        grid=grid,
        in_specs=[x_spec] + w_specs,
        out_specs=out_spec,
        compiler_params=pltpu.CompilerParams(
            dimension_semantics=("parallel",),
            vmem_limit_bytes=32 * 1024 * 1024),
        cost_estimate=cost,
    )(x_bf16, *weights)

    return out[:batch, :n_classes]


def init_params(key, d_in, enc_hidden, input_size, n_classes):
    """Deterministic synthetic parameters (PyTorch Linear shapes, stored transposed)."""
    ks = jax.random.split(key, 10)

    def lin(kw, kb, fan_in, fan_out):
        bound = 1.0 / jnp.sqrt(fan_in)
        w = jax.random.uniform(kw, (fan_in, fan_out), jnp.float32, -bound, bound)
        b = jax.random.uniform(kb, (1, fan_out), jnp.float32, -bound, bound)
        return w, b

    we1, be1 = lin(ks[0], ks[1], d_in, enc_hidden)
    we2, be2 = lin(ks[2], ks[3], enc_hidden, input_size)
    w1, b1 = lin(ks[4], ks[5], input_size, 64)
    w2, b2 = lin(ks[6], ks[7], 64, 32)
    w3, b3 = lin(ks[8], ks[9], 32, n_classes)
    return dict(we1=we1, be1=be1, we2=we2, be2=be2,
                w1=w1, b1=b1, w2=w2, b2=b2, w3=w3, b3=b3)


def reference_forward(x, p):
    """Pure-JAX reference mirroring the kernel's bf16-weight / f32-accum numerics."""
    def bf(a):
        return a.astype(jnp.bfloat16).astype(jnp.float32)

    def lin_relu(h, w, b):
        h = h.astype(jnp.bfloat16).astype(jnp.float32)
        return jax.nn.relu(h @ bf(w) + bf(b))

    h = lin_relu(x, p["we1"], p["be1"])
    h = lin_relu(h, p["we2"], p["be2"])
    h = lin_relu(h, p["w1"], p["b1"])
    h = lin_relu(h, p["w2"], p["b2"])
    h = h.astype(jnp.bfloat16).astype(jnp.float32)
    logits = h @ bf(p["w3"]) + bf(p["b3"])
    return jax.nn.softmax(logits, axis=1)


if __name__ == "__main__":
    # Small shapes consistent with the module's forward:
    batch = 8
    d_in = 32          # raw feature dim fed to the (assumed) encoder
    enc_hidden = 32    # encoder hidden width
    input_size = 16    # encoder output dim == Classifier.inputSize
    n_classes = 10     # Classifier.nClasses

    key = jax.random.PRNGKey(0)
    kx, kp = jax.random.split(key)
    x = jax.random.normal(kx, (batch, d_in), dtype=jnp.float32)
    params = init_params(kp, d_in, enc_hidden, input_size, n_classes)

    out = classifier_forward(x, params, n_classes=n_classes)
    out = jax.block_until_ready(out)

    ref = reference_forward(x, params)
    assert out.shape == (batch, n_classes)
    # bf16 weights/activations + approx EUP reciprocal -> loose-ish tolerance.
    assert jnp.allclose(out, ref, atol=2e-2, rtol=2e-2)
    assert jnp.allclose(jnp.sum(out, axis=1), jnp.ones((batch,)), atol=2e-2)

    print("KERNEL_OK")
</pallas_src>

<mosaic_0001>
module attributes {stable_mosaic.version = 11 : i64} {
  func.func @classifier_kernel(%arg0: i32, %arg1: memref<8x32xbf16, #tpu.memory_space<vmem>>, %arg2: memref<32x32xbf16, #tpu.memory_space<vmem>>, %arg3: memref<1x32xbf16, #tpu.memory_space<vmem>>, %arg4: memref<32x16xbf16, #tpu.memory_space<vmem>>, %arg5: memref<1x16xbf16, #tpu.memory_space<vmem>>, %arg6: memref<16x64xbf16, #tpu.memory_space<vmem>>, %arg7: memref<1x64xbf16, #tpu.memory_space<vmem>>, %arg8: memref<64x32xbf16, #tpu.memory_space<vmem>>, %arg9: memref<1x32xbf16, #tpu.memory_space<vmem>>, %arg10: memref<32x128xbf16, #tpu.memory_space<vmem>>, %arg11: memref<1x128xbf16, #tpu.memory_space<vmem>>, %arg12: memref<8x128xf32, #tpu.memory_space<vmem>>) attributes {dimension_semantics = [#tpu.dimension_semantics<parallel>], iteration_bounds = array<i64: 1>, scalar_prefetch = 0 : i64, scratch_operands = 0 : i64, tpu.core_type = #tpu.core_type<tc>, window_params = [{transform_indices = @transform_0, window_bounds = array<i64: 8, 32>}, {pipeline_mode = #tpu.pipeline_mode<synchronous>, transform_indices = @transform_1, window_bounds = array<i64: 32, 32>}, {pipeline_mode = #tpu.pipeline_mode<synchronous>, transform_indices = @transform_2, window_bounds = array<i64: 1, 32>}, {pipeline_mode = #tpu.pipeline_mode<synchronous>, transform_indices = @transform_3, window_bounds = array<i64: 32, 16>}, {pipeline_mode = #tpu.pipeline_mode<synchronous>, transform_indices = @transform_4, window_bounds = array<i64: 1, 16>}, {pipeline_mode = #tpu.pipeline_mode<synchronous>, transform_indices = @transform_5, window_bounds = array<i64: 16, 64>}, {pipeline_mode = #tpu.pipeline_mode<synchronous>, transform_indices = @transform_6, window_bounds = array<i64: 1, 64>}, {pipeline_mode = #tpu.pipeline_mode<synchronous>, transform_indices = @transform_7, window_bounds = array<i64: 64, 32>}, {pipeline_mode = #tpu.pipeline_mode<synchronous>, transform_indices = @transform_8, window_bounds = array<i64: 1, 32>}, {pipeline_mode = #tpu.pipeline_mode<synchronous>, transform_indices = @transform_9, window_bounds = array<i64: 32, 128>}, {pipeline_mode = #tpu.pipeline_mode<synchronous>, transform_indices = @transform_10, window_bounds = array<i64: 1, 128>}, {transform_indices = @transform_11, window_bounds = array<i64: 8, 128>}]} {
    %c0 = arith.constant 0 : index
    %c0_0 = arith.constant 0 : index
    %0 = vector.load %arg1[%c0, %c0_0] : memref<8x32xbf16, #tpu.memory_space<vmem>>, vector<8x32xbf16>
    %c0_1 = arith.constant 0 : index
    %c0_2 = arith.constant 0 : index
    %1 = vector.load %arg2[%c0_1, %c0_2] : memref<32x32xbf16, #tpu.memory_space<vmem>>, vector<32x32xbf16>
    %cst = arith.constant dense<0.000000e+00> : vector<8x32xf32>
    %2 = tpu.matmul %0, %1, %cst {dimension_numbers = #tpu.dot_dimension_numbers<[1], [0], [0], [1], [0, 0, 1, 1], [], []>} : vector<8x32xbf16>, vector<32x32xbf16>, vector<8x32xf32> -> vector<8x32xf32>
    %c0_3 = arith.constant 0 : index
    %c0_4 = arith.constant 0 : index
    %3 = vector.load %arg3[%c0_3, %c0_4] : memref<1x32xbf16, #tpu.memory_space<vmem>>, vector<1x32xbf16>
    %4 = arith.extf %3 : vector<1x32xbf16> to vector<1x32xf32>
    %5 = vector.broadcast %4 : vector<1x32xf32> to vector<8x32xf32>
    %6 = arith.addf %2, %5 : vector<8x32xf32>
    %cst_5 = arith.constant 0.000000e+00 : f32
    %7 = vector.broadcast %cst_5 : f32 to vector<8x32xf32>
    %8 = arith.maximumf %6, %7 : vector<8x32xf32>
    %9 = arith.truncf %8 : vector<8x32xf32> to vector<8x32xbf16>
    %c0_6 = arith.constant 0 : index
    %c0_7 = arith.constant 0 : index
    %10 = vector.load %arg4[%c0_6, %c0_7] : memref<32x16xbf16, #tpu.memory_space<vmem>>, vector<32x16xbf16>
    %cst_8 = arith.constant dense<0.000000e+00> : vector<8x16xf32>
    %11 = tpu.matmul %9, %10, %cst_8 {dimension_numbers = #tpu.dot_dimension_numbers<[1], [0], [0], [1], [0, 0, 1, 1], [], []>} : vector<8x32xbf16>, vector<32x16xbf16>, vector<8x16xf32> -> vector<8x16xf32>
    %c0_9 = arith.constant 0 : index
    %c0_10 = arith.constant 0 : index
    %12 = vector.load %arg5[%c0_9, %c0_10] : memref<1x16xbf16, #tpu.memory_space<vmem>>, vector<1x16xbf16>
    %13 = arith.extf %12 : vector<1x16xbf16> to vector<1x16xf32>
    %14 = vector.broadcast %13 : vector<1x16xf32> to vector<8x16xf32>
    %15 = arith.addf %11, %14 : vector<8x16xf32>
    %cst_11 = arith.constant 0.000000e+00 : f32
    %16 = vector.broadcast %cst_11 : f32 to vector<8x16xf32>
    %17 = arith.maximumf %15, %16 : vector<8x16xf32>
    %18 = arith.truncf %17 : vector<8x16xf32> to vector<8x16xbf16>
    %c0_12 = arith.constant 0 : index
    %c0_13 = arith.constant 0 : index
    %19 = vector.load %arg6[%c0_12, %c0_13] : memref<16x64xbf16, #tpu.memory_space<vmem>>, vector<16x64xbf16>
    %cst_14 = arith.constant dense<0.000000e+00> : vector<8x64xf32>
    %20 = tpu.matmul %18, %19, %cst_14 {dimension_numbers = #tpu.dot_dimension_numbers<[1], [0], [0], [1], [0, 0, 1, 1], [], []>} : vector<8x16xbf16>, vector<16x64xbf16>, vector<8x64xf32> -> vector<8x64xf32>
    %c0_15 = arith.constant 0 : index
    %c0_16 = arith.constant 0 : index
    %21 = vector.load %arg7[%c0_15, %c0_16] : memref<1x64xbf16, #tpu.memory_space<vmem>>, vector<1x64xbf16>
    %22 = arith.extf %21 : vector<1x64xbf16> to vector<1x64xf32>
    %23 = vector.broadcast %22 : vector<1x64xf32> to vector<8x64xf32>
    %24 = arith.addf %20, %23 : vector<8x64xf32>
    %cst_17 = arith.constant 0.000000e+00 : f32
    %25 = vector.broadcast %cst_17 : f32 to vector<8x64xf32>
    %26 = arith.maximumf %24, %25 : vector<8x64xf32>
    %27 = arith.truncf %26 : vector<8x64xf32> to vector<8x64xbf16>
    %c0_18 = arith.constant 0 : index
    %c0_19 = arith.constant 0 : index
    %28 = vector.load %arg8[%c0_18, %c0_19] : memref<64x32xbf16, #tpu.memory_space<vmem>>, vector<64x32xbf16>
    %cst_20 = arith.constant dense<0.000000e+00> : vector<8x32xf32>
    %29 = tpu.matmul %27, %28, %cst_20 {dimension_numbers = #tpu.dot_dimension_numbers<[1], [0], [0], [1], [0, 0, 1, 1], [], []>} : vector<8x64xbf16>, vector<64x32xbf16>, vector<8x32xf32> -> vector<8x32xf32>
    %c0_21 = arith.constant 0 : index
    %c0_22 = arith.constant 0 : index
    %30 = vector.load %arg9[%c0_21, %c0_22] : memref<1x32xbf16, #tpu.memory_space<vmem>>, vector<1x32xbf16>
    %31 = arith.extf %30 : vector<1x32xbf16> to vector<1x32xf32>
    %32 = vector.broadcast %31 : vector<1x32xf32> to vector<8x32xf32>
    %33 = arith.addf %29, %32 : vector<8x32xf32>
    %cst_23 = arith.constant 0.000000e+00 : f32
    %34 = vector.broadcast %cst_23 : f32 to vector<8x32xf32>
    %35 = arith.maximumf %33, %34 : vector<8x32xf32>
    %36 = arith.truncf %35 : vector<8x32xf32> to vector<8x32xbf16>
    %c0_24 = arith.constant 0 : index
    %c0_25 = arith.constant 0 : index
    %37 = vector.load %arg10[%c0_24, %c0_25] : memref<32x128xbf16, #tpu.memory_space<vmem>>, vector<32x128xbf16>
    %cst_26 = arith.constant dense<0.000000e+00> : vector<8x128xf32>
    %38 = tpu.matmul %36, %37, %cst_26 {dimension_numbers = #tpu.dot_dimension_numbers<[1], [0], [0], [1], [0, 0, 1, 1], [], []>} : vector<8x32xbf16>, vector<32x128xbf16>, vector<8x128xf32> -> vector<8x128xf32>
    %c0_27 = arith.constant 0 : index
    %c0_28 = arith.constant 0 : index
    %39 = vector.load %arg11[%c0_27, %c0_28] : memref<1x128xbf16, #tpu.memory_space<vmem>>, vector<1x128xbf16>
    %40 = arith.extf %39 : vector<1x128xbf16> to vector<1x128xf32>
    %41 = vector.broadcast %40 : vector<1x128xf32> to vector<8x128xf32>
    %42 = arith.addf %38, %41 : vector<8x128xf32>
    %43 = tpu.iota {dimensions = array<i32: 1>} : vector<8x128xi32>
    %c10_i32 = arith.constant 10 : i32
    %44 = vector.broadcast %c10_i32 : i32 to vector<8x128xi32>
    %45 = arith.cmpi slt, %43, %44 : vector<8x128xi32>
    %cst_29 = arith.constant -1.000000e+30 : f32
    %46 = vector.broadcast %cst_29 : f32 to vector<8x128xf32>
    %47 = arith.select %45, %42, %46 : vector<8x128xi1>, vector<8x128xf32>
    %cst_30 = arith.constant dense<0xFF800000> : vector<8xf32>
    %48 = vector.multi_reduction <maximumf>, %47, %cst_30 [1] : vector<8x128xf32> to vector<8xf32>
    %49 = vector.shape_cast %48 : vector<8xf32> to vector<8x1xf32>
    %50 = vector.broadcast %49 : vector<8x1xf32> to vector<8x128xf32>
    %51 = arith.subf %47, %50 : vector<8x128xf32>
    %52 = math.exp %51 : vector<8x128xf32>
    %cst_31 = arith.constant dense<0.000000e+00> : vector<8xf32>
    %53 = vector.multi_reduction <add>, %52, %cst_31 [1] : vector<8x128xf32> to vector<8xf32>
    %54 = vector.shape_cast %53 : vector<8xf32> to vector<8x1xf32>
    %55 = tpu.reciprocal %54 {approx = true} : vector<8x1xf32> -> vector<8x1xf32>
    %56 = vector.broadcast %55 : vector<8x1xf32> to vector<8x128xf32>
    %57 = arith.mulf %52, %56 : vector<8x128xf32>
    %c0_32 = arith.constant 0 : index
    %c0_33 = arith.constant 0 : index
    %58 = vector.load %arg12[%c0_32, %c0_33] : memref<8x128xf32, #tpu.memory_space<vmem>>, vector<8x128xf32>
    tpu.vector_store %arg12[%c0_32, %c0_33], %57 {strides = array<i32>} : memref<8x128xf32, #tpu.memory_space<vmem>>, vector<8x128xf32>,
    return
  }
  func.func @transform_0(%arg0: i32) -> (i32, i32) {
    %c0_i32 = arith.constant 0 : i32
    %c0_i32_0 = arith.constant 0 : i32
    return %arg0, %c0_i32 : i32, i32
  }
  func.func @transform_1(%arg0: i32) -> (i32, i32) {
    %c0_i32 = arith.constant 0 : i32
    %c0_i32_0 = arith.constant 0 : i32
    %c0_i32_1 = arith.constant 0 : i32
    return %c0_i32, %c0_i32_0 : i32, i32
  }
  func.func @transform_2(%arg0: i32) -> (i32, i32) {
    %c0_i32 = arith.constant 0 : i32
    %c0_i32_0 = arith.constant 0 : i32
    %c0_i32_1 = arith.constant 0 : i32
    return %c0_i32, %c0_i32_0 : i32, i32
  }
  func.func @transform_3(%arg0: i32) -> (i32, i32) {
    %c0_i32 = arith.constant 0 : i32
    %c0_i32_0 = arith.constant 0 : i32
    %c0_i32_1 = arith.constant 0 : i32
    return %c0_i32, %c0_i32_0 : i32, i32
  }
  func.func @transform_4(%arg0: i32) -> (i32, i32) {
    %c0_i32 = arith.constant 0 : i32
    %c0_i32_0 = arith.constant 0 : i32
    %c0_i32_1 = arith.constant 0 : i32
    return %c0_i32, %c0_i32_0 : i32, i32
  }
  func.func @transform_5(%arg0: i32) -> (i32, i32) {
    %c0_i32 = arith.constant 0 : i32
    %c0_i32_0 = arith.constant 0 : i32
    %c0_i32_1 = arith.constant 0 : i32
    return %c0_i32, %c0_i32_0 : i32, i32
  }
  func.func @transform_6(%arg0: i32) -> (i32, i32) {
    %c0_i32 = arith.constant 0 : i32
    %c0_i32_0 = arith.constant 0 : i32
    %c0_i32_1 = arith.constant 0 : i32
    return %c0_i32, %c0_i32_0 : i32, i32
  }
  func.func @transform_7(%arg0: i32) -> (i32, i32) {
    %c0_i32 = arith.constant 0 : i32
    %c0_i32_0 = arith.constant 0 : i32
    %c0_i32_1 = arith.constant 0 : i32
    return %c0_i32, %c0_i32_0 : i32, i32
  }
  func.func @transform_8(%arg0: i32) -> (i32, i32) {
    %c0_i32 = arith.constant 0 : i32
    %c0_i32_0 = arith.constant 0 : i32
    %c0_i32_1 = arith.constant 0 : i32
    return %c0_i32, %c0_i32_0 : i32, i32
  }
  func.func @transform_9(%arg0: i32) -> (i32, i32) {
    %c0_i32 = arith.constant 0 : i32
    %c0_i32_0 = arith.constant 0 : i32
    %c0_i32_1 = arith.constant 0 : i32
    return %c0_i32, %c0_i32_0 : i32, i32
  }
  func.func @transform_10(%arg0: i32) -> (i32, i32) {
    %c0_i32 = arith.constant 0 : i32
    %c0_i32_0 = arith.constant 0 : i32
    %c0_i32_1 = arith.constant 0 : i32
    return %c0_i32, %c0_i32_0 : i32, i32
  }
  func.func @transform_11(%arg0: i32) -> (i32, i32) {
    %c0_i32 = arith.constant 0 : i32
    %c0_i32_0 = arith.constant 0 : i32
    return %arg0, %c0_i32 : i32, i32
  }
}

</mosaic_0001>

<llo_original>
// kernel: tpu_custom_call.1
$region0: #{tpu_custom_call.1}
  #allocation0 [shape = 'u32[]', space=smem, size = 0x4, offset = 0x4, fixed_abs, tag = 'smem constant byte address 0x4 - core index']
  #allocation1 [shape = 'u32[144,128]{1,0:T(1,128)}', space=vmem, size = 0x12000, scoped, tag = 'internal scratch']
  %s0 = inlined_call_operand.vmem [shape: bf16[8,32], index: 0, kind: input, shape index: {}]
  %s1 = inlined_call_operand.vmem [shape: bf16[32,32], index: 1, kind: input, shape index: {}]
  %s2 = inlined_call_operand.vmem [shape: bf16[1,32], index: 2, kind: input, shape index: {}]
  %s3 = inlined_call_operand.vmem [shape: bf16[32,16], index: 3, kind: input, shape index: {}]
  %s4 = inlined_call_operand.vmem [shape: bf16[1,16], index: 4, kind: input, shape index: {}]
  %s5 = inlined_call_operand.vmem [shape: bf16[16,64], index: 5, kind: input, shape index: {}]
  %s6 = inlined_call_operand.vmem [shape: bf16[1,64], index: 6, kind: input, shape index: {}]
  %s7 = inlined_call_operand.vmem [shape: bf16[64,32], index: 7, kind: input, shape index: {}]
  %s8 = inlined_call_operand.vmem [shape: bf16[1,32], index: 8, kind: input, shape index: {}]
  %s9 = inlined_call_operand.vmem [shape: bf16[32,128], index: 9, kind: input, shape index: {}]
  %s10 = inlined_call_operand.vmem [shape: bf16[1,128], index: 10, kind: input, shape index: {}]
  %s11 = inlined_call_operand.hbm [shape: f32[8,128], index: 11, kind: output, shape index: {}]
  %s12 = sld [smem:[#allocation0]]
  $region54: #{tpu_custom_call.1} parent=0
    _
  %s14 = ssub.s32 1, %s12
  %s15 = scalar_select 0, %s14, %s12
  $region1: #{tpu_custom_call.1} parent=0
    #allocation2 [shape = 'u8[4096]{0}', space=vmem, size = 0x1000, scoped, tag = 'output window, operand 0, single buffered']
    #allocation3 [shape = 's32[1]{0}', space=sflag, size = 0x4, scoped, tag = 'scoped memory for tpu_custom_call.1']
    %16 = vsyncpa [#allocation3], 0
    // Predicated region
    $region2: #{tpu_custom_call.1} parent=1 // pred_check
      _
    $region3: #{tpu_custom_call.1} parent=1 // pred_check_branch
      %18 = sbr.rel (0) target = $region5
    $region4: #{tpu_custom_call.1} parent=1 // pred_region
      _
    $region5: #{tpu_custom_call.1} parent=1 // pred_fallthru
      _
    // Predicated region
    $region6: #{tpu_custom_call.1} parent=1 // pred_check
      _
    $region7: #{tpu_custom_call.1} parent=1 // pred_check_branch
      %20 = sbr.rel (0) target = $region9
    $region8: #{tpu_custom_call.1} parent=1 // pred_region
      _
    $region9: #{tpu_custom_call.1} parent=1 // pred_fallthru
      _
    // Predicated region
    $region10: #{tpu_custom_call.1} parent=1 // pred_check
      _
    $region11: #{tpu_custom_call.1} parent=1 // pred_check_branch
      %22 = sbr.rel (0) target = $region13
    $region12: #{tpu_custom_call.1} parent=1 // pred_region
      _
    $region13: #{tpu_custom_call.1} parent=1 // pred_fallthru
      _
    // Predicated region
    $region14: #{tpu_custom_call.1} parent=1 // pred_check
      _
    $region15: #{tpu_custom_call.1} parent=1 // pred_check_branch
      %24 = sbr.rel (0) target = $region17
    $region16: #{tpu_custom_call.1} parent=1 // pred_region
      _
    $region17: #{tpu_custom_call.1} parent=1 // pred_fallthru
      _
    // Predicated region
    $region18: #{tpu_custom_call.1} parent=1 // pred_check
      _
    $region19: #{tpu_custom_call.1} parent=1 // pred_check_branch
      %26 = sbr.rel (0) target = $region21
    $region20: #{tpu_custom_call.1} parent=1 // pred_region
      _
    $region21: #{tpu_custom_call.1} parent=1 // pred_fallthru
      _
    // Predicated region
    $region22: #{tpu_custom_call.1} parent=1 // pred_check
      _
    $region23: #{tpu_custom_call.1} parent=1 // pred_check_branch
      %28 = sbr.rel (0) target = $region25
    $region24: #{tpu_custom_call.1} parent=1 // pred_region
      _
    $region25: #{tpu_custom_call.1} parent=1 // pred_fallthru
      _
    // Predicated region
    $region26: #{tpu_custom_call.1} parent=1 // pred_check
      _
    $region27: #{tpu_custom_call.1} parent=1 // pred_check_branch
      %30 = sbr.rel (0) target = $region29
    $region28: #{tpu_custom_call.1} parent=1 // pred_region
      _
    $region29: #{tpu_custom_call.1} parent=1 // pred_fallthru
      _
    // Predicated region
    $region30: #{tpu_custom_call.1} parent=1 // pred_check
      _
    $region31: #{tpu_custom_call.1} parent=1 // pred_check_branch
      %32 = sbr.rel (0) target = $region33
    $region32: #{tpu_custom_call.1} parent=1 // pred_region
      _
    $region33: #{tpu_custom_call.1} parent=1 // pred_fallthru
      _
    // Predicated region
    $region34: #{tpu_custom_call.1} parent=1 // pred_check
      _
    $region35: #{tpu_custom_call.1} parent=1 // pred_check_branch
      %34 = sbr.rel (0) target = $region37
    $region36: #{tpu_custom_call.1} parent=1 // pred_region
      _
    $region37: #{tpu_custom_call.1} parent=1 // pred_fallthru
      _
    // Predicated region
    $region38: #{tpu_custom_call.1} parent=1 // pred_check
      _
    $region39: #{tpu_custom_call.1} parent=1 // pred_check_branch
      %36 = sbr.rel (0) target = $region41
    $region40: #{tpu_custom_call.1} parent=1 // pred_region
      _
    $region41: #{tpu_custom_call.1} parent=1 // pred_fallthru
      _
    // Predicated region
    $region42: #{tpu_custom_call.1} parent=1 // pred_check
      _
    $region43: #{tpu_custom_call.1} parent=1 // pred_check_branch
      %38 = sbr.rel (0) target = $region45
    $region44: #{tpu_custom_call.1} parent=1 // pred_region
      _
    $region45: #{tpu_custom_call.1} parent=1 // pred_fallthru
      _
    %v40 = vld [vmem:[%s0] sm:$0xf]
    %v41 = vld [vmem:[%s1] sm:$0xf]
    %v42 = vld [vmem:[%s1 + $0x4] sm:$0xf]
    %v43 = vld [vmem:[%s1 + $0x8] sm:$0xf]
    %v44 = vld [vmem:[%s1 + $0xc] sm:$0xf]
    %v45 = vld [vmem:[%s2] sm:$0x1]
    %v46 = vunpack.c.l.bf16 %v45
    %v47 = vlaneseq
    %v48 = vshrl.u32 %v47, 7
    %v49 = vsub.s32 0, %v48
    %v50 = vrot.slane %v46, %v49
    %v55 = vunpack.c.l.b16 %v41
    %v56 = vunpack.c.l.b16 %v42
    %v57 = vunpack.c.l.b16 %v43
    %v58 = vunpack.c.l.b16 %v44
    %v59 = vpack.c.b16 %v56, %v55
    %v60 = vpack.c.b16 %v58, %v57
    %vm63 = vcmask 261120
    %v65 = vsel %vm63, %v40, 0
    %67 = vmatprep.subr.bf16.mxu0 0
    %68 = vmatpush1.bf16.msra.mxu0 %v59
    %69 = vmatprep.subr.bf16.mxu0 0
    %70 = vmatpush1.bf16.msra.mxu0 %v60
    %71 = vmatprep.subr.bf16.mxu0 0
    %72 = vmatpush1.bf16.msra.mxu0 0
    %73 = vmatprep.subr.bf16.mxu0 0
    %74 = vmatpush1.bf16.msra.mxu0 0
    %75 = vmatprep.subr.bf16.mxu0 0
    %76 = vmatpush1.bf16.msra.mxu0 0
    %77 = vmatprep.subr.bf16.mxu0 0
    %78 = vmatpush1.bf16.msra.mxu0 0
    %79 = vmatprep.subr.bf16.mxu0 0
    %80 = vmatpush1.bf16.msra.mxu0 0
    %81 = vmatprep.subr.bf16.mxu0 0
    %82 = vmatpush1.bf16.msra.mxu0 0
    %83 = vmatprep.subr.bf16.mxu0 0
    %84 = vmatpush1.bf16.msra.mxu0 0
    %85 = vmatprep.subr.bf16.mxu0 0
    %86 = vmatpush1.bf16.msra.mxu0 0
    %87 = vmatprep.subr.bf16.mxu0 0
    %88 = vmatpush1.bf16.msra.mxu0 0
    %89 = vmatprep.subr.bf16.mxu0 0
    %90 = vmatpush1.bf16.msra.mxu0 0
    %91 = vmatprep.subr.bf16.mxu0 0
    %92 = vmatpush1.bf16.msra.mxu0 0
    %93 = vmatprep.subr.bf16.mxu0 0
    %94 = vmatpush1.bf16.msra.mxu0 0
    %95 = vmatprep.subr.bf16.mxu0 0
    %96 = vmatpush1.bf16.msra.mxu0 0
    %97 = vmatprep.subr.bf16.mxu0 0
    %98 = vmatpush1.bf16.msra.mxu0 0
    %99 = vmatprep.mubr.bf16.mxu0 0
    %100 = vmatmul.mubr.bf16.gmra.mrb[0].mxu0 %v65
    %v101 = vpop.f32.mrb[0].mxu0
    %v102 = vadd.f32 %v50, %v101
    %v103 = vpop.f32.mrb[0].mxu0
    %v104 = vpop.f32.mrb[0].mxu0
    %v105 = vpop.f32.mrb[0].mxu0
    %106 = vdwg.mxu0
    %v107 = vmax.f32 %v102, 0.0
    %v108 = vpack.c.bf16 %v107, %v107
    %v109 = vld [vmem:[%s3] sm:$0xf]
    %v110 = vld [vmem:[%s3 + $0x4] sm:$0xf]
    %v111 = vld [vmem:[%s3 + $0x8] sm:$0xf]
    %v112 = vld [vmem:[%s3 + $0xc] sm:$0xf]
    %v113 = vld [vmem:[%s4] sm:$0x1]
    %v114 = vunpack.c.l.bf16 %v113
    %v115 = vlaneseq
    %v116 = vshrl.u32 %v115, 7
    %v117 = vsub.s32 0, %v116
    %v118 = vrot.slane %v114, %v117
    %v123 = vunpack.c.l.b16 %v109
    %v124 = vunpack.c.l.b16 %v110
    %v125 = vunpack.c.l.b16 %v111
    %v126 = vunpack.c.l.b16 %v112
    %v127 = vpack.c.b16 %v124, %v123
    %v128 = vpack.c.b16 %v126, %v125
    %v132 = vsel %vm63, %v108, 0
    %134 = vmatprep.subr.bf16.mxu0 0
    %135 = vmatpush1.bf16.msra.mxu0 %v127
    %136 = vmatprep.subr.bf16.mxu0 0
    %137 = vmatpush1.bf16.msra.mxu0 %v128
    %138 = vmatprep.subr.bf16.mxu0 0
    %139 = vmatpush1.bf16.msra.mxu0 0
    %140 = vmatprep.subr.bf16.mxu0 0
    %141 = vmatpush1.bf16.msra.mxu0 0
    %142 = vmatprep.subr.bf16.mxu0 0
    %143 = vmatpush1.bf16.msra.mxu0 0
    %144 = vmatprep.subr.bf16.mxu0 0
    %145 = vmatpush1.bf16.msra.mxu0 0
    %146 = vmatprep.subr.bf16.mxu0 0
    %147 = vmatpush1.bf16.msra.mxu0 0
    %148 = vmatprep.subr.bf16.mxu0 0
    %149 = vmatpush1.bf16.msra.mxu0 0
    %150 = vmatprep.subr.bf16.mxu0 0
    %151 = vmatpush1.bf16.msra.mxu0 0
    %152 = vmatprep.subr.bf16.mxu0 0
    %153 = vmatpush1.bf16.msra.mxu0 0
    %154 = vmatprep.subr.bf16.mxu0 0
    %155 = vmatpush1.bf16.msra.mxu0 0
    %156 = vmatprep.subr.bf16.mxu0 0
    %157 = vmatpush1.bf16.msra.mxu0 0
    %158 = vmatprep.subr.bf16.mxu0 0
    %159 = vmatpush1.bf16.msra.mxu0 0
    %160 = vmatprep.subr.bf16.mxu0 0
    %161 = vmatpush1.bf16.msra.mxu0 0
    %162 = vmatprep.subr.bf16.mxu0 0
    %163 = vmatpush1.bf16.msra.mxu0 0
    %164 = vmatprep.subr.bf16.mxu0 0
    %165 = vmatpush1.bf16.msra.mxu0 0
    %166 = vmatprep.mubr.bf16.mxu0 0
    %167 = vmatmul.mubr.bf16.gmra.mrb[0].mxu0 %v132
    %v168 = vpop.f32.mrb[0].mxu0
    %v169 = vadd.f32 %v118, %v168
    %v170 = vpop.f32.mrb[0].mxu0
    %v171 = vpop.f32.mrb[0].mxu0
    %v172 = vpop.f32.mrb[0].mxu0
    %173 = vdwg.mxu0
    %v174 = vmax.f32 %v169, 0.0
    %v175 = vpack.c.bf16 %v174, %v174
    %v176 = vld [vmem:[%s5] sm:$0xf]
    %v177 = vld [vmem:[%s5 + $0x4] sm:$0xf]
    %v178 = vld [vmem:[%s6] sm:$0x1]
    %v179 = vunpack.c.l.bf16 %v178
    %v180 = vlaneseq
    %v181 = vshrl.u32 %v180, 7
    %v182 = vsub.s32 0, %v181
    %v183 = vrot.slane %v179, %v182
    %v186 = vunpack.c.l.b16 %v176
    %v187 = vunpack.c.l.b16 %v177
    %v188 = vpack.c.b16 %v187, %v186
    %vm190 = vcmask 130048
    %v192 = vsel %vm190, %v175, 0
    %194 = vmatprep.subr.bf16.mxu0 0
    %195 = vmatpush1.bf16.msra.mxu0 %v188
    %196 = vmatprep.subr.bf16.mxu0 0
    %197 = vmatpush1.bf16.msra.mxu0 0
    %198 = vmatprep.subr.bf16.mxu0 0
    %199 = vmatpush1.bf16.msra.mxu0 0
    %200 = vmatprep.subr.bf16.mxu0 0
    %201 = vmatpush1.bf16.msra.mxu0 0
    %202 = vmatprep.subr.bf16.mxu0 0
    %203 = vmatpush1.bf16.msra.mxu0 0
    %204 = vmatprep.subr.bf16.mxu0 0
    %205 = vmatpush1.bf16.msra.mxu0 0
    %206 = vmatprep.subr.bf16.mxu0 0
    %207 = vmatpush1.bf16.msra.mxu0 0
    %208 = vmatprep.subr.bf16.mxu0 0
    %209 = vmatpush1.bf16.msra.mxu0 0
    %210 = vmatprep.subr.bf16.mxu0 0
    %211 = vmatpush1.bf16.msra.mxu0 0
    %212 = vmatprep.subr.bf16.mxu0 0
    %213 = vmatpush1.bf16.msra.mxu0 0
    %214 = vmatprep.subr.bf16.mxu0 0
    %215 = vmatpush1.bf16.msra.mxu0 0
    %216 = vmatprep.subr.bf16.mxu0 0
    %217 = vmatpush1.bf16.msra.mxu0 0
    %218 = vmatprep.subr.bf16.mxu0 0
    %219 = vmatpush1.bf16.msra.mxu0 0
    %220 = vmatprep.subr.bf16.mxu0 0
    %221 = vmatpush1.bf16.msra.mxu0 0
    %222 = vmatprep.subr.bf16.mxu0 0
    %223 = vmatpush1.bf16.msra.mxu0 0
    %224 = vmatprep.subr.bf16.mxu0 0
    %225 = vmatpush1.bf16.msra.mxu0 0
    %226 = vmatprep.mubr.bf16.mxu0 0
    %227 = vmatmul.mubr.bf16.gmra.mrb[0].mxu0 %v192
    %v228 = vpop.f32.mrb[0].mxu0
    %v229 = vadd.f32 %v183, %v228
    %v230 = vpop.f32.mrb[0].mxu0
    %v231 = vpop.f32.mrb[0].mxu0
    %v232 = vpop.f32.mrb[0].mxu0
    %233 = vdwg.mxu0
    %v234 = vmax.f32 %v229, 0.0
    %v235 = vpack.c.bf16 %v234, %v234
    %v236 = vld [vmem:[%s7] sm:$0xf]
    %v237 = vld [vmem:[%s7 + $0x4] sm:$0xf]
    %v238 = vld [vmem:[%s7 + $0x8] sm:$0xf]
    %v239 = vld [vmem:[%s7 + $0xc] sm:$0xf]
    %v240 = vld [vmem:[%s7 + $0x10] sm:$0xf]
    %v241 = vld [vmem:[%s7 + $0x14] sm:$0xf]
    %v242 = vld [vmem:[%s7 + $0x18] sm:$0xf]
    %v243 = vld [vmem:[%s7 + $0x1c] sm:$0xf]
    %v244 = vld [vmem:[%s8] sm:$0x1]
    %v245 = vunpack.c.l.bf16 %v244
    %v246 = vlaneseq
    %v247 = vshrl.u32 %v246, 7
    %v248 = vsub.s32 0, %v247
    %v249 = vrot.slane %v245, %v248
    %v258 = vunpack.c.l.b16 %v236
    %v259 = vunpack.c.l.b16 %v237
    %v260 = vunpack.c.l.b16 %v238
    %v261 = vunpack.c.l.b16 %v239
    %v262 = vunpack.c.l.b16 %v240
    %v263 = vunpack.c.l.b16 %v241
    %v264 = vunpack.c.l.b16 %v242
    %v265 = vunpack.c.l.b16 %v243
    %v266 = vpack.c.b16 %v259, %v258
    %v267 = vpack.c.b16 %v261, %v260
    %v268 = vpack.c.b16 %v263, %v262
    %v269 = vpack.c.b16 %v265, %v264
    %vm274 = vcmask 523264
    %v276 = vsel %vm274, %v235, 0
    %278 = vmatprep.subr.bf16.mxu0 0
    %279 = vmatpush1.bf16.msra.mxu0 %v266
    %280 = vmatprep.subr.bf16.mxu0 0
    %281 = vmatpush1.bf16.msra.mxu0 %v267
    %282 = vmatprep.subr.bf16.mxu0 0
    %283 = vmatpush1.bf16.msra.mxu0 %v268
    %284 = vmatprep.subr.bf16.mxu0 0
    %285 = vmatpush1.bf16.msra.mxu0 %v269
    %286 = vmatprep.subr.bf16.mxu0 0
    %287 = vmatpush1.bf16.msra.mxu0 0
    %288 = vmatprep.subr.bf16.mxu0 0
    %289 = vmatpush1.bf16.msra.mxu0 0
    %290 = vmatprep.subr.bf16.mxu0 0
    %291 = vmatpush1.bf16.msra.mxu0 0
    %292 = vmatprep.subr.bf16.mxu0 0
    %293 = vmatpush1.bf16.msra.mxu0 0
    %294 = vmatprep.subr.bf16.mxu0 0
    %295 = vmatpush1.bf16.msra.mxu0 0
    %296 = vmatprep.subr.bf16.mxu0 0
    %297 = vmatpush1.bf16.msra.mxu0 0
    %298 = vmatprep.subr.bf16.mxu0 0
    %299 = vmatpush1.bf16.msra.mxu0 0
    %300 = vmatprep.subr.bf16.mxu0 0
    %301 = vmatpush1.bf16.msra.mxu0 0
    %302 = vmatprep.subr.bf16.mxu0 0
    %303 = vmatpush1.bf16.msra.mxu0 0
    %304 = vmatprep.subr.bf16.mxu0 0
    %305 = vmatpush1.bf16.msra.mxu0 0
    %306 = vmatprep.subr.bf16.mxu0 0
    %307 = vmatpush1.bf16.msra.mxu0 0
    %308 = vmatprep.subr.bf16.mxu0 0
    %309 = vmatpush1.bf16.msra.mxu0 0
    %310 = vmatprep.mubr.bf16.mxu0 0
    %311 = vmatmul.mubr.bf16.gmra.mrb[0].mxu0 %v276
    %v312 = vpop.f32.mrb[0].mxu0
    %v313 = vadd.f32 %v249, %v312
    %v314 = vpop.f32.mrb[0].mxu0
    %v315 = vpop.f32.mrb[0].mxu0
    %v316 = vpop.f32.mrb[0].mxu0
    %317 = vdwg.mxu0
    %v318 = vmax.f32 %v313, 0.0
    %v319 = vpack.c.bf16 %v318, %v318
    %v320 = vld [vmem:[%s9] sm:$0xf]
    %v321 = vld [vmem:[%s9 + $0x4] sm:$0xf]
    %v322 = vld [vmem:[%s9 + $0x8] sm:$0xf]
    %v323 = vld [vmem:[%s9 + $0xc] sm:$0xf]
    %v324 = vld [vmem:[%s10] sm:$0x1]
    %v325 = vunpack.c.l.bf16 %v324
    %v326 = vlaneseq
    %v327 = vshrl.u32 %v326, 7
    %v328 = vsub.s32 0, %v327
    %v329 = vrot.slane %v325, %v328
    %v334 = vunpack.c.l.b16 %v320
    %v335 = vunpack.c.l.b16 %v321
    %v336 = vunpack.c.l.b16 %v322
    %v337 = vunpack.c.l.b16 %v323
    %v338 = vpack.c.b16 %v335, %v334
    %v339 = vpack.c.b16 %v337, %v336
    %v343 = vsel %vm63, %v319, 0
    %345 = vmatprep.subr.bf16.mxu0 0
    %346 = vmatpush1.bf16.msra.mxu0 %v338
    %347 = vmatprep.subr.bf16.mxu0 0
    %348 = vmatpush1.bf16.msra.mxu0 %v339
    %349 = vmatprep.subr.bf16.mxu0 0
    %350 = vmatpush1.bf16.msra.mxu0 0
    %351 = vmatprep.subr.bf16.mxu0 0
    %352 = vmatpush1.bf16.msra.mxu0 0
    %353 = vmatprep.subr.bf16.mxu0 0
    %354 = vmatpush1.bf16.msra.mxu0 0
    %355 = vmatprep.subr.bf16.mxu0 0
    %356 = vmatpush1.bf16.msra.mxu0 0
    %357 = vmatprep.subr.bf16.mxu0 0
    %358 = vmatpush1.bf16.msra.mxu0 0
    %359 = vmatprep.subr.bf16.mxu0 0
    %360 = vmatpush1.bf16.msra.mxu0 0
    %361 = vmatprep.subr.bf16.mxu0 0
    %362 = vmatpush1.bf16.msra.mxu0 0
    %363 = vmatprep.subr.bf16.mxu0 0
    %364 = vmatpush1.bf16.msra.mxu0 0
    %365 = vmatprep.subr.bf16.mxu0 0
    %366 = vmatpush1.bf16.msra.mxu0 0
    %367 = vmatprep.subr.bf16.mxu0 0
    %368 = vmatpush1.bf16.msra.mxu0 0
    %369 = vmatprep.subr.bf16.mxu0 0
    %370 = vmatpush1.bf16.msra.mxu0 0
    %371 = vmatprep.subr.bf16.mxu0 0
    %372 = vmatpush1.bf16.msra.mxu0 0
    %373 = vmatprep.subr.bf16.mxu0 0
    %374 = vmatpush1.bf16.msra.mxu0 0
    %375 = vmatprep.subr.bf16.mxu0 0
    %376 = vmatpush1.bf16.msra.mxu0 0
    %377 = vmatprep.mubr.bf16.mxu0 0
    %378 = vmatmul.mubr.bf16.gmra.mrb[0].mxu0 %v343
    %v379 = vpop.f32.mrb[0].mxu0
    %v380 = vadd.f32 %v329, %v379
    %v381 = vpop.f32.mrb[0].mxu0
    %v382 = vpop.f32.mrb[0].mxu0
    %v383 = vpop.f32.mrb[0].mxu0
    %384 = vdwg.mxu0
    %v385 = vlaneseq
    %v386 = vand.u32 %v385, 127
    %vm387 = vcmp.lt.s32.totalorder %v386, 10
    %v388 = vsel %vm387, %v380, -1e+30
    %389 = vmax.xlane.f32.xlu0 %v388
    %v390 = vpop.xlane.xlu0 %389
    %v391 = vsub.f32 %v388, %v390
    %v392 = vmul.f32 %v391, 1.442695
    %v393 = vpow.pop %v392
    %394 = vadd.xlane.f32.xlu0 %v393
    %v395 = vpop.xlane.xlu0 %394
    %v396 = vrcp.pop %v395
    %v397 = vmul.f32 %v393, %v396
    %398 = vst [vmem:[#allocation2] sm:$0xff] %v397
    // Predicated region
    $region46: #{tpu_custom_call.1} parent=1 // pred_check
      _
    $region47: #{tpu_custom_call.1} parent=1 // pred_check_branch
      %400 = sbr.rel (0) target = $region49
    $region48: #{tpu_custom_call.1} parent=1 // pred_region
      %s402 = ssub.s32 128, 128
      %403 = vsyncadd [#allocation3], %s402
      %s405 = sshll.u32 [#allocation2], 4
      %s406 = int_to_ptr.vmem [resolvable:$true] %s405
      %408 = dma.vmem_to_hbm [thread:$0]  %s406, 128, %s11, [#allocation3]
    $region49: #{tpu_custom_call.1} parent=1 // pred_fallthru
      _
    // Predicated region
    $region50: #{tpu_custom_call.1} parent=1 // pred_check
      _
    $region51: #{tpu_custom_call.1} parent=1 // pred_check_branch
      %410 = sbr.rel (0) target = $region53
    $region52: #{tpu_custom_call.1} parent=1 // pred_region
      %411 = dma.done [#allocation3], 128
    $region53: #{tpu_custom_call.1} parent=1 // pred_fallthru
      _
    %412 = vsyncpa [#allocation3], 1

</llo_original>
